<compile_context>
chip_gen: v7x
topology: tpu7x:2x2x1
jax: 0.10.0
libtpu: 0.0.40
codegen_flags: <defaults>
</compile_context>

<pallas_src>
import functools
import math

import jax
import jax.numpy as jnp
from jax.experimental import pallas as pl
from jax.experimental.pallas import tpu as pltpu


def _round_up(x, m):
    return ((x + m - 1) // m) * m


def arcface_kernel(lab_ref, emb_ref, ker_ref, out_ref, inv_col_ref,
                   *, s, cos_m, sin_m, block_c):
    """One (tb, tc) output tile: MXU matmul + column-norm scale + clamp + margin + s."""
    j = pl.program_id(0)   # class-tile index (outer, slow)
    i = pl.program_id(1)   # batch-tile index (inner, fast)

    # Column inverse L2 norms of the resident weight stripe, computed once per
    # stripe (first batch step of each class tile) and reused for every batch tile.
    @pl.when(i == 0)
    def _():
        w = ker_ref[...].astype(jnp.float32)
        inv_col_ref[...] = 1.0 / jnp.sqrt(jnp.sum(w * w, axis=0, keepdims=True))

    # Raw (bf16 or f32) tiles feed the MXU directly; accumulate in f32.
    dot = jnp.dot(emb_ref[...], ker_ref[...], preferred_element_type=jnp.float32)

    # Embeddings were pre-normalized in the wrapper, so one column scale suffices.
    cos_t = jnp.clip(dot * inv_col_ref[...], -1.0, 1.0)

    # Margin: at column == label add m to the angle.  The column iota is offset by
    # this tile's global column start; label == -1 never matches since col >= 0.
    lab = lab_ref[...]                                                  # (tb, 1) int32
    col = block_c * j + jax.lax.broadcasted_iota(jnp.int32, cos_t.shape, 1)
    apply_m = col == lab

    # cos(acos(x) + m) = x*cos(m) - sqrt(1 - x^2)*sin(m)    (theta in [0, pi])
    sin_t = jnp.sqrt(jnp.maximum(1.0 - cos_t * cos_t, 0.0))
    cos_t_m = cos_t * cos_m - sin_t * sin_m

    out_ref[...] = (jnp.where(apply_m, cos_t_m, cos_t) * s).astype(out_ref.dtype)


def _vmem_capacity_bytes():
    try:
        return int(pltpu.get_tpu_info().vmem_capacity_bytes)
    except Exception:                              # pragma: no cover
        return 64 * 1024 * 1024                    # conservative (v7x) fallback


def arcface_forward(embeddings, label, kernel, s=64.0, m=0.5,
                    *, block_b=None, block_c=None, out_dtype=jnp.float32):
    """ArcFace logits.

    `kernel` should already be stored in the desired MXU dtype (e.g. bf16,
    pre-cast once outside the step) -- the wrapper never casts the D x C weight.
    """
    B, D = embeddings.shape
    D2, C = kernel.shape
    assert D == D2

    in_bytes = jnp.dtype(kernel.dtype).itemsize
    out_bytes = jnp.dtype(out_dtype).itemsize
    row_mult = 16 if in_bytes < 4 else 8           # bf16 sublane packing

    vmem_cap = _vmem_capacity_bytes()
    budget = int(vmem_cap * 0.6)

    # --- tile selection: multiples of (8/16, 128), sized against the VMEM budget ---
    tb = block_b if block_b is not None else 512
    tb = max(row_mult, min(_round_up(tb, row_mult), _round_up(B, row_mult)))
    tc = block_c if block_c is not None else 2048
    tc = max(128, min(_round_up(tc, 128), _round_up(C, 128)))

    def footprint(tb_, tc_):
        # double-buffered emb / weight / label / output blocks + norm scratch
        return (2 * (tb_ * D * in_bytes + D * tc_ * in_bytes
                     + tb_ * tc_ * out_bytes + tb_ * 4)
                + tc_ * 4)

    while footprint(tb, tc) > budget and tc > 128:
        tc -= 128
    while footprint(tb, tc) > budget and tb > row_mult:
        tb -= row_mult

    fp = footprint(tb, tc)
    vmem_limit = int(min(0.9 * vmem_cap,
                         max(32 * 1024 * 1024, 1.5 * fp + (4 << 20))))

    # --- wrapper-side prep: tiny O(B*D) work only (no D x C pass, no weight cast) ---
    emb_f32 = embeddings.astype(jnp.float32)
    # NOTE: zero-norm rows give inf/NaN, matching the reference's divide-by-zero.
    inv_row = jax.lax.rsqrt(jnp.sum(emb_f32 * emb_f32, axis=1, keepdims=True))
    emb_n = (emb_f32 * inv_row).astype(kernel.dtype)
    label2d = label.astype(jnp.int32).reshape(B, 1)

    grid = (pl.cdiv(C, tc), pl.cdiv(B, tb))        # class OUTER, batch INNER

    fn = pl.pallas_call(
        functools.partial(arcface_kernel, s=float(s),
                          cos_m=math.cos(m), sin_m=math.sin(m), block_c=tc),
        out_shape=jax.ShapeDtypeStruct((B, C), out_dtype),
        grid=grid,
        in_specs=[
            pl.BlockSpec((tb, 1), lambda j, i: (i, 0)),   # labels per batch tile
            pl.BlockSpec((tb, D), lambda j, i: (i, 0)),   # normalized embeddings
            pl.BlockSpec((D, tc), lambda j, i: (0, j)),   # weight stripe: constant in i
        ],
        out_specs=pl.BlockSpec((tb, tc), lambda j, i: (i, j)),
        scratch_shapes=[pltpu.VMEM((1, tc), jnp.float32)],  # per-stripe column inv-norms
        compiler_params=pltpu.CompilerParams(
            dimension_semantics=("parallel", "arbitrary"),
            vmem_limit_bytes=vmem_limit,
        ),
    )
    return fn(label2d, emb_n, kernel)


def arcface_reference(embeddings, label, kernel, s=64.0, m=0.5):
    """Plain-JAX reference mirroring the PyTorch forward (acos/cos formulation)."""
    emb_n = embeddings / jnp.linalg.norm(embeddings, axis=1, keepdims=True)
    ker_n = kernel / jnp.linalg.norm(kernel, axis=0, keepdims=True)
    cos_t = jnp.clip(emb_n @ ker_n, -1.0, 1.0)
    theta = jnp.arccos(cos_t)
    col = jnp.arange(cos_t.shape[1])[None, :]
    m_hot = jnp.where((label[:, None] != -1) & (col == label[:, None]), m, 0.0)
    return jnp.cos(theta + m_hot) * s


if __name__ == "__main__":
    key = jax.random.PRNGKey(0)
    k_emb, k_ker, k_lab, k_emb2, k_ker2, k_lab2 = jax.random.split(key, 6)

    # ---- Case 1: evenly dividing shapes, multi-tile grid ----
    B, D, C = 16, 32, 512
    embeddings = jax.random.normal(k_emb, (B, D), dtype=jnp.float32)
    weight = 0.01 * jax.random.normal(k_ker, (D, C), dtype=jnp.float32)   # nn.init.normal_(std=0.01)
    label = jax.random.randint(k_lab, (B,), 0, C, dtype=jnp.int32)
    label = label.at[1].set(-1).at[5].set(-1)
    ref = arcface_reference(embeddings, label, weight, s=64.0, m=0.5)

    # f32 MXU path (tight semantic check; grid = 4 class tiles x 2 batch tiles).
    out_f32 = jax.block_until_ready(
        arcface_forward(embeddings, label, weight, s=64.0, m=0.5,
                        block_b=8, block_c=128))
    assert out_f32.shape == (B, C)
    assert jnp.allclose(out_f32, ref, atol=2e-2, rtol=1e-3), "f32 path mismatch vs reference"

    # Production path: classifier weight persisted in bf16 (cast ONCE, outside the call).
    weight_bf16 = weight.astype(jnp.bfloat16)
    out_bf16 = jax.block_until_ready(
        arcface_forward(embeddings, label, weight_bf16, s=64.0, m=0.5,
                        block_b=16, block_c=128))
    assert jnp.allclose(out_bf16, ref, atol=1.0, rtol=2e-2), "bf16 path mismatch vs reference"

    # ---- Case 2: ragged dims (B=12, C=600 not multiples of 8/128) ----
    B2, D2, C2 = 12, 32, 600
    emb2 = jax.random.normal(k_emb2, (B2, D2), dtype=jnp.float32)
    w2 = 0.01 * jax.random.normal(k_ker2, (D2, C2), dtype=jnp.float32)
    lab2 = jax.random.randint(k_lab2, (B2,), 0, C2, dtype=jnp.int32).at[0].set(-1)
    ref2 = arcface_reference(emb2, lab2, w2, s=64.0, m=0.5)
    w2_bf16 = w2.astype(jnp.bfloat16)

    # Explicit small tiles: exercises partial class AND batch blocks (masked stores).
    out2 = jax.block_until_ready(
        arcface_forward(emb2, lab2, w2_bf16, s=64.0, m=0.5, block_b=8, block_c=128))
    assert out2.shape == (B2, C2)
    assert jnp.allclose(out2, ref2, atol=1.0, rtol=2e-2), "ragged bf16 path mismatch"

    # Auto tile selection + bf16 logits output (halved output HBM stream).
    out2_bf16 = jax.block_until_ready(
        arcface_forward(emb2, lab2, w2_bf16, s=64.0, m=0.5, out_dtype=jnp.bfloat16))
    assert out2_bf16.dtype == jnp.bfloat16
    assert jnp.allclose(out2_bf16.astype(jnp.float32), ref2, atol=1.5, rtol=3e-2), \
        "bf16-output path mismatch"

    print("KERNEL_OK")
</pallas_src>

<mosaic_0001>
module attributes {stable_mosaic.version = 11 : i64} {
  func.func @arcface_kernel(%arg0: i32, %arg1: i32, %arg2: memref<8x1xi32, #tpu.memory_space<vmem>>, %arg3: memref<8x32xf32, #tpu.memory_space<vmem>>, %arg4: memref<32x128xf32, #tpu.memory_space<vmem>>, %arg5: memref<8x128xf32, #tpu.memory_space<vmem>>, %arg6: memref<1x128xf32, #tpu.memory_space<vmem>>) attributes {dimension_semantics = [#tpu.dimension_semantics<parallel>, #tpu.dimension_semantics<arbitrary>], iteration_bounds = array<i64: 4, 2>, scalar_prefetch = 0 : i64, scratch_operands = 1 : i64, tpu.core_type = #tpu.core_type<tc>, window_params = [{transform_indices = @transform_0, window_bounds = array<i64: 8, 1>}, {transform_indices = @transform_1, window_bounds = array<i64: 8, 32>}, {transform_indices = @transform_2, window_bounds = array<i64: 32, 128>}, {transform_indices = @transform_3, window_bounds = array<i64: 8, 128>}]} {
    %c0_i32 = arith.constant 0 : i32
    %0 = arith.cmpi eq, %arg1, %c0_i32 : i32
    %1 = arith.extui %0 : i1 to i32
    %c0_i32_0 = arith.constant 0 : i32
    %2 = arith.cmpi ne, %1, %c0_i32_0 : i32
    scf.if %2 {
      %c0_17 = arith.constant 0 : index
      %c0_18 = arith.constant 0 : index
      %35 = vector.load %arg4[%c0_17, %c0_18] : memref<32x128xf32, #tpu.memory_space<vmem>>, vector<32x128xf32>
      %36 = arith.mulf %35, %35 : vector<32x128xf32>
      %cst_19 = arith.constant dense<0.000000e+00> : vector<128xf32>
      %37 = vector.multi_reduction <add>, %36, %cst_19 [0] : vector<32x128xf32> to vector<128xf32>
      %38 = vector.shape_cast %37 : vector<128xf32> to vector<1x128xf32>
      %39 = math.sqrt %38 : vector<1x128xf32>
      %cst_20 = arith.constant 1.000000e+00 : f32
      %40 = vector.broadcast %cst_20 : f32 to vector<1x128xf32>
      %41 = arith.divf %40, %39 : vector<1x128xf32>
      %c0_21 = arith.constant 0 : index
      %c0_22 = arith.constant 0 : index
      %42 = vector.load %arg6[%c0_21, %c0_22] : memref<1x128xf32, #tpu.memory_space<vmem>>, vector<1x128xf32>
      tpu.vector_store %arg6[%c0_21, %c0_22], %41 {strides = array<i32>} : memref<1x128xf32, #tpu.memory_space<vmem>>, vector<1x128xf32>,
    } else {
    }
    %c0 = arith.constant 0 : index
    %c0_1 = arith.constant 0 : index
    %3 = vector.load %arg3[%c0, %c0_1] : memref<8x32xf32, #tpu.memory_space<vmem>>, vector<8x32xf32>
    %c0_2 = arith.constant 0 : index
    %c0_3 = arith.constant 0 : index
    %4 = vector.load %arg4[%c0_2, %c0_3] : memref<32x128xf32, #tpu.memory_space<vmem>>, vector<32x128xf32>
    %cst = arith.constant dense<0.000000e+00> : vector<8x128xf32>
    %5 = tpu.matmul %3, %4, %cst {dimension_numbers = #tpu.dot_dimension_numbers<[1], [0], [0], [1], [0, 0, 1, 1], [], []>} : vector<8x32xf32>, vector<32x128xf32>, vector<8x128xf32> -> vector<8x128xf32>
    %c0_4 = arith.constant 0 : index
    %c0_5 = arith.constant 0 : index
    %6 = vector.load %arg6[%c0_4, %c0_5] : memref<1x128xf32, #tpu.memory_space<vmem>>, vector<1x128xf32>
    %7 = vector.broadcast %6 : vector<1x128xf32> to vector<8x128xf32>
    %8 = arith.mulf %5, %7 : vector<8x128xf32>
    %cst_6 = arith.constant -1.000000e+00 : f32
    %cst_7 = arith.constant 1.000000e+00 : f32
    %9 = vector.broadcast %cst_6 : f32 to vector<8x128xf32>
    %10 = arith.maximumf %9, %8 : vector<8x128xf32>
    %11 = vector.broadcast %cst_7 : f32 to vector<8x128xf32>
    %12 = arith.minimumf %11, %10 : vector<8x128xf32>
    %c0_8 = arith.constant 0 : index
    %c0_9 = arith.constant 0 : index
    %13 = vector.load %arg2[%c0_8, %c0_9] : memref<8x1xi32, #tpu.memory_space<vmem>>, vector<8x1xi32>
    %c128_i32 = arith.constant 128 : i32
    %14 = arith.muli %c128_i32, %arg0 : i32
    %15 = tpu.iota {dimensions = array<i32: 1>} : vector<8x128xi32>
    %16 = vector.broadcast %14 : i32 to vector<8x128xi32>
    %17 = arith.addi %16, %15 : vector<8x128xi32>
    %18 = vector.broadcast %13 : vector<8x1xi32> to vector<8x128xi32>
    %19 = arith.cmpi eq, %17, %18 : vector<8x128xi32>
    %20 = arith.mulf %12, %12 : vector<8x128xf32>
    %cst_10 = arith.constant 1.000000e+00 : f32
    %21 = vector.broadcast %cst_10 : f32 to vector<8x128xf32>
    %22 = arith.subf %21, %20 : vector<8x128xf32>
    %cst_11 = arith.constant 0.000000e+00 : f32
    %23 = vector.broadcast %cst_11 : f32 to vector<8x128xf32>
    %24 = arith.maximumf %22, %23 : vector<8x128xf32>
    %25 = math.sqrt %24 : vector<8x128xf32>
    %cst_12 = arith.constant 0.87758255 : f32
    %26 = vector.broadcast %cst_12 : f32 to vector<8x128xf32>
    %27 = arith.mulf %12, %26 : vector<8x128xf32>
    %cst_13 = arith.constant 0.47942555 : f32
    %28 = vector.broadcast %cst_13 : f32 to vector<8x128xf32>
    %29 = arith.mulf %25, %28 : vector<8x128xf32>
    %30 = arith.subf %27, %29 : vector<8x128xf32>
    %31 = arith.select %19, %30, %12 : vector<8x128xi1>, vector<8x128xf32>
    %cst_14 = arith.constant 6.400000e+01 : f32
    %32 = vector.broadcast %cst_14 : f32 to vector<8x128xf32>
    %33 = arith.mulf %31, %32 : vector<8x128xf32>
    %c0_15 = arith.constant 0 : index
    %c0_16 = arith.constant 0 : index
    %34 = vector.load %arg5[%c0_15, %c0_16] : memref<8x128xf32, #tpu.memory_space<vmem>>, vector<8x128xf32>
    tpu.vector_store %arg5[%c0_15, %c0_16], %33 {strides = array<i32>} : memref<8x128xf32, #tpu.memory_space<vmem>>, vector<8x128xf32>,
    return
  }
  func.func @transform_0(%arg0: i32, %arg1: i32) -> (i32, i32) {
    %c0_i32 = arith.constant 0 : i32
    %c0_i32_0 = arith.constant 0 : i32
    return %arg1, %c0_i32 : i32, i32
  }
  func.func @transform_1(%arg0: i32, %arg1: i32) -> (i32, i32) {
    %c0_i32 = arith.constant 0 : i32
    %c0_i32_0 = arith.constant 0 : i32
    return %arg1, %c0_i32 : i32, i32
  }
  func.func @transform_2(%arg0: i32, %arg1: i32) -> (i32, i32) {
    %c0_i32 = arith.constant 0 : i32
    %c0_i32_0 = arith.constant 0 : i32
    return %c0_i32, %arg0 : i32, i32
  }
  func.func @transform_3(%arg0: i32, %arg1: i32) -> (i32, i32) {
    %c0_i32 = arith.constant 0 : i32
    return %arg1, %arg0 : i32, i32
  }
}

</mosaic_0001>

<llo_original>
// kernel: tpu_custom_call.1
$region0: #{tpu_custom_call.1}
  #allocation0 [shape = 'u32[]', space=smem, size = 0x4, offset = 0x4, fixed_abs, tag = 'smem constant byte address 0x4 - core index']
  #allocation1 [shape = 'u32[144,128]{1,0:T(1,128)}', space=vmem, size = 0x12000, scoped, tag = 'internal scratch']
  #allocation2 [shape = 'f32[1,128]{1,0:T(1,128)}', space=vmem, size = 0x200, scoped, tag = 'scratch operand']
  %s0 = inlined_call_operand.vmem [shape: s32[16,1], index: 0, kind: input, shape index: {}]
  %s1 = inlined_call_operand.vmem [shape: f32[16,32], index: 1, kind: input, shape index: {}]
  %s2 = inlined_call_operand.hbm [shape: f32[32,512], index: 2, kind: input, shape index: {}]
  %s3 = inlined_call_operand.hbm [shape: f32[16,512], index: 3, kind: output, shape index: {}]
  %s4 = sld [smem:[#allocation0]]
  $region53: #{tpu_custom_call.1} parent=0
    _
  %s6 = ssub.s32 1, %s4
  %s7 = scalar_select 0, %s6, %s4
  $region1: #{tpu_custom_call.1} parent=0
    #allocation3 [shape = 'u8[32768]{0}', space=vmem, size = 0x8000, scoped, tag = 'input window, operand 2']
    #allocation4 [shape = 's32[2]{0}', space=sflag, size = 0x8, scoped, tag = 'scoped memory for tpu_custom_call.1']
    #allocation5 [shape = 's32[2]{0}', space=sflag, size = 0x8, scoped, tag = 'scoped memory for tpu_custom_call.1']
    #allocation6 [shape = 'u8[8192]{0}', space=vmem, size = 0x2000, scoped, tag = 'output window, operand 0']
    %8 = vsyncpa [#allocation4], 0
    %s9 = scalar_lea.sflag [#allocation4], 1
    %10 = vsyncpa %s9, 0
    %11 = vsyncpa [#allocation5], 0
    %s12 = scalar_lea.sflag [#allocation5], 1
    %13 = vsyncpa %s12, 0
    loop: start=0, step=1, limit=10
    $region2: #{tpu_custom_call.1} parent=1 // loop_pre_header
      _
    $region3: #{tpu_custom_call.1} parent=1 // loop_header
      %s15 = sphi 0, %s19
      %p16 = scmp.ge.s32.totalorder %s15, 10
      %s22 = sphi 0, %s34
      %s23 = sphi 0, %s30
      %s24 = sphi 0, %s22
      %s25 = sphi 0, %s23
      %s26 = sphi 0, %s24
      %s27 = sphi 0, %s25
      %s37 = sphi 0, %s39
      %s40 = sphi 0, %s37
      %s41 = sphi 0, %s40
      %s57 = sphi 0, %s41
      %s63 = sphi 0, %s65
      %s66 = sphi 0, %s63
      %s67 = sphi 0, %s66
      %s83 = sphi 0, %s67
      %s89 = sphi 0, %s91
      %s92 = sphi 0, %s89
      %s93 = sphi 0, %s92
      %s109 = sphi 0, %s93
      %s117 = sphi 0, %s119
      %s120 = sphi 0, %s117
      %s121 = sphi 0, %s120
      %s137 = sphi 0, %s121
    $region4: #{tpu_custom_call.1} parent=1 // loop_header_branch
      %18 = sbr.rel (%p16) target = $region8
    $region5: #{tpu_custom_call.1} parent=1 // loop_body
      %s20 = ssub.s32 %s15, 1
      %s21 = ssub.s32 %s15, 2
      %s28 = sadd.s32 1, %s23
      %p29 = scmp.ge.s32.totalorder %s28, 2
      %s30 = scalar_select %p29, 0, %s28
      %s31 = sadd.s32 1, %s22
      %s32 = scalar_select %p29, %s31, %s22
      %p33 = scmp.ge.s32.totalorder %s32, 4
      %s34 = scalar_select %p33, 0, %s32
      %s35 = ssub.s32 %s23, %s30
      %p36 = scmp.eq.s32.totalorder %s35, 0
      %s38 = sadd.s32 %s37, 1
      %s39 = scalar_select %p36, %s37, %s38
      %p42 = pneg %p36
      %p43 = scmp.eq.s32.totalorder %s15, 7
      %p44 = por %p42, %p43
      %p45 = scmp.ne.s32.totalorder %s37, %s40
      %p46 = scmp.eq.s32.totalorder %s15, 0
      %p47 = por %p45, %p46
      %p48 = scmp.ne.s32.totalorder %s37, %s40
      %p49 = scmp.eq.s32.totalorder %s20, 7
      %p50 = por %p48, %p49
      %p51 = scmp.ne.s32.totalorder %s40, %s41
      %p52 = scmp.eq.s32.totalorder %s20, 0
      %p53 = por %p51, %p52
      %p54 = scmp.ne.s32.totalorder %s40, %s41
      %p55 = scmp.eq.s32.totalorder %s21, 7
      %p56 = por %p54, %p55
      %p58 = scmp.ne.s32.totalorder %s41, %s57
      %p59 = scmp.eq.s32.totalorder %s21, 0
      %p60 = por %p58, %p59
      %s61 = ssub.s32 %s23, %s30
      %p62 = scmp.eq.s32.totalorder %s61, 0
      %s64 = sadd.s32 %s63, 1
      %s65 = scalar_select %p62, %s63, %s64
      %p68 = pneg %p62
      %p69 = scmp.eq.s32.totalorder %s15, 7
      %p70 = por %p68, %p69
      %p71 = scmp.ne.s32.totalorder %s63, %s66
      %p72 = scmp.eq.s32.totalorder %s15, 0
      %p73 = por %p71, %p72
      %p74 = scmp.ne.s32.totalorder %s63, %s66
      %p75 = scmp.eq.s32.totalorder %s20, 7
      %p76 = por %p74, %p75
      %p77 = scmp.ne.s32.totalorder %s66, %s67
      %p78 = scmp.eq.s32.totalorder %s20, 0
      %p79 = por %p77, %p78
      %p80 = scmp.ne.s32.totalorder %s66, %s67
      %p81 = scmp.eq.s32.totalorder %s21, 7
      %p82 = por %p80, %p81
      %p84 = scmp.ne.s32.totalorder %s67, %s83
      %p85 = scmp.eq.s32.totalorder %s21, 0
      %p86 = por %p84, %p85
      %s87 = ssub.s32 %s22, %s34
      %p88 = scmp.eq.s32.totalorder %s87, 0
      %s90 = sadd.s32 %s89, 1
      %s91 = scalar_select %p88, %s89, %s90
      %p94 = pneg %p88
      %p95 = scmp.eq.s32.totalorder %s15, 7
      %p96 = por %p94, %p95
      %p97 = scmp.ne.s32.totalorder %s89, %s92
      %p98 = scmp.eq.s32.totalorder %s15, 0
      %p99 = por %p97, %p98
      %p100 = scmp.ne.s32.totalorder %s89, %s92
      %p101 = scmp.eq.s32.totalorder %s20, 7
      %p102 = por %p100, %p101
      %p103 = scmp.ne.s32.totalorder %s92, %s93
      %p104 = scmp.eq.s32.totalorder %s20, 0
      %p105 = por %p103, %p104
      %p106 = scmp.ne.s32.totalorder %s92, %s93
      %p107 = scmp.eq.s32.totalorder %s21, 7
      %p108 = por %p106, %p107
      %p110 = scmp.ne.s32.totalorder %s93, %s109
      %p111 = scmp.eq.s32.totalorder %s21, 0
      %p112 = por %p110, %p111
      %s113 = ssub.s32 %s23, %s30
      %s114 = ssub.s32 %s22, %s34
      %s115 = sor.u32 %s113, %s114
      %p116 = scmp.eq.s32.totalorder %s115, 0
      %s118 = sadd.s32 %s117, 1
      %s119 = scalar_select %p116, %s117, %s118
      %p122 = pneg %p116
      %p123 = scmp.eq.s32.totalorder %s15, 7
      %p124 = por %p122, %p123
      %p125 = scmp.ne.s32.totalorder %s117, %s120
      %p126 = scmp.eq.s32.totalorder %s15, 0
      %p127 = por %p125, %p126
      %p128 = scmp.ne.s32.totalorder %s117, %s120
      %p129 = scmp.eq.s32.totalorder %s20, 7
      %p130 = por %p128, %p129
      %p131 = scmp.ne.s32.totalorder %s120, %s121
      %p132 = scmp.eq.s32.totalorder %s20, 0
      %p133 = por %p131, %p132
      %p134 = scmp.ne.s32.totalorder %s120, %s121
      %p135 = scmp.eq.s32.totalorder %s21, 7
      %p136 = por %p134, %p135
      %p138 = scmp.ne.s32.totalorder %s121, %s137
      %p139 = scmp.eq.s32.totalorder %s21, 0
      %p140 = por %p138, %p139
      %p141 = scmp.le.s32.totalorder 1, %s15
      %p142 = scmp.lt.s32.totalorder %s15, 9
      %p143 = pnand %p141, %p142
      %p144 = pneg %p143
      // Predicated region
      $region9: #{tpu_custom_call.1} parent=5 // pred_check
        _
      $region10: #{tpu_custom_call.1} parent=5 // pred_check_branch
        %146 = sbr.rel (%p143) target = $region12
      $region11: #{tpu_custom_call.1} parent=5 // pred_region
        %s147 = ssub.s32 %s15, 1
      $region12: #{tpu_custom_call.1} parent=5 // pred_fallthru
        _
      %p148 = scmp.lt.s32.totalorder %s15, 8
      // Predicated region
      $region13: #{tpu_custom_call.1} parent=5 // pred_check
        %p149 = pneg %p148
      $region14: #{tpu_custom_call.1} parent=5 // pred_check_branch
        %151 = sbr.rel (%p149) target = $region16
      $region15: #{tpu_custom_call.1} parent=5 // pred_region
        // Predicated region
        $region17: #{tpu_custom_call.1} parent=15 // pred_check
          %p152 = pneg %p47
        $region18: #{tpu_custom_call.1} parent=15 // pred_check_branch
          %154 = sbr.rel (%p152) target = $region20
        $region19: #{tpu_custom_call.1} parent=15 // pred_region
          %p155 = scmp.lt.s32.totalorder %s23, 1
          %s156 = scalar_select %p155, %s23, 1
          %s157 = smul.addr %s156, 8
          %s158 = scalar_lea.vmem %s0, %s157
        $region20: #{tpu_custom_call.1} parent=15 // pred_fallthru
          _
        // Predicated region
        $region21: #{tpu_custom_call.1} parent=15 // pred_check
          %p159 = pneg %p73
        $region22: #{tpu_custom_call.1} parent=15 // pred_check_branch
          %161 = sbr.rel (%p159) target = $region24
        $region23: #{tpu_custom_call.1} parent=15 // pred_region
          %p162 = scmp.lt.s32.totalorder %s23, 1
          %s163 = scalar_select %p162, %s23, 1
          %s164 = smul.addr %s163, 8
          %s165 = scalar_lea.vmem %s1, %s164
        $region24: #{tpu_custom_call.1} parent=15 // pred_fallthru
          _
        // Predicated region
        $region25: #{tpu_custom_call.1} parent=15 // pred_check
          %p166 = pneg %p99
        $region26: #{tpu_custom_call.1} parent=15 // pred_check_branch
          %168 = sbr.rel (%p166) target = $region28
        $region27: #{tpu_custom_call.1} parent=15 // pred_region
          %s169 = sand.u32 %s89, 1
          %s170 = scalar_lea.sflag [#allocation4], %s169
          %s171 = sand.u32 %s89, 1
          %s172 = smul.addr %s171, 32
          %s173 = scalar_lea.vmem [#allocation3], %s172
          %s175 = ssub.s32 512, 512
          %176 = vsyncadd %s170, %s175
          %s177 = smul.addr %s22, 128
          %s178 = scalar_lea.hbm %s2, %s177
          %s179 = sshll.u32 %s173, 4
          %s180 = int_to_ptr.vmem [resolvable:$true] %s179
          %185 = dma.hbm_to_vmem [thread:$0]  %s178, 512, %s180, %s170, 512, 128, 8
        $region28: #{tpu_custom_call.1} parent=15 // pred_fallthru
          _
      $region16: #{tpu_custom_call.1} parent=5 // pred_fallthru
        _
      %p186 = scmp.le.s32.totalorder 1, %s15
      %p187 = scmp.lt.s32.totalorder %s15, 9
      %p188 = pnand %p186, %p187
      %p189 = pneg %p188
      // Predicated region
      $region29: #{tpu_custom_call.1} parent=5 // pred_check
        _
      $region30: #{tpu_custom_call.1} parent=5 // pred_check_branch
        %191 = sbr.rel (%p188) target = $region32
      $region31: #{tpu_custom_call.1} parent=5 // pred_region
        %s192 = ssub.s32 %s15, 1
        %s193 = sand.u32 %s92, 1
        %s194 = scalar_lea.sflag [#allocation4], %s193
        %s195 = sand.u32 %s92, 1
        %s196 = smul.addr %s195, 32
        %s197 = scalar_lea.vmem [#allocation3], %s196
        // Predicated region
        $region33: #{tpu_custom_call.1} parent=31 // pred_check
          %p198 = pneg %p105
        $region34: #{tpu_custom_call.1} parent=31 // pred_check_branch
          %200 = sbr.rel (%p198) target = $region36
        $region35: #{tpu_custom_call.1} parent=31 // pred_region
          %201 = dma.done %s194, 512
        $region36: #{tpu_custom_call.1} parent=31 // pred_fallthru
          _
        %p202 = scmp.lt.s32.totalorder %s25, 1
        %s203 = scalar_select %p202, %s25, 1
        %s204 = smul.addr %s203, 8
        %s205 = scalar_lea.vmem %s0, %s204
        %p206 = pneg %p53
        %p207 = pneg %p50
        %p208 = scmp.lt.s32.totalorder %s25, 1
        %s209 = scalar_select %p208, %s25, 1
        %s210 = smul.addr %s209, 8
        %s211 = scalar_lea.vmem %s1, %s210
        %p212 = pneg %p79
        %p213 = pneg %p76
        %s214 = sand.u32 %s92, 1
        %s215 = scalar_lea.sflag [#allocation4], %s214
        %s216 = sand.u32 %s92, 1
        %s217 = smul.addr %s216, 32
        %s218 = scalar_lea.vmem [#allocation3], %s217
        %p219 = pneg %p105
        %p220 = pneg %p102
        %p221 = pneg %p133
        %p222 = pneg %p130
        %s223 = sand.u32 %s120, 1
        %s224 = scalar_lea.sflag [#allocation5], %s223
        %s225 = sand.u32 %s120, 1
        %s226 = smul.addr %s225, 8
        %s227 = scalar_lea.vmem [#allocation6], %s226
        %p228 = scmp.lt.s32.totalorder %s25, 1
        %s229 = scalar_select %p228, %s25, 1
        %s230 = smul.addr %s229, 8
        %s231 = scalar_lea.vmem %s0, %s230
        %p232 = scmp.lt.s32.totalorder %s25, 1
        %s233 = scalar_select %p232, %s25, 1
        %s234 = smul.addr %s233, 8
        %s235 = scalar_lea.vmem %s1, %s234
        %p236 = scmp.eq.s32.totalorder %s25, 0
        // Predicated region
        $region37: #{tpu_custom_call.1} parent=31 // pred_check
          %p237 = pneg %p236
        $region38: #{tpu_custom_call.1} parent=31 // pred_check_branch
          %239 = sbr.rel (%p237) target = $region40
        $region39: #{tpu_custom_call.1} parent=31 // pred_region
          %v240 = vld [vmem:[%s197] sm:$0xff]
          %v241 = vld [vmem:[%s197 + $0x8] sm:$0xff]
          %v242 = vld [vmem:[%s197 + $0x10] sm:$0xff]
          %v243 = vld [vmem:[%s197 + $0x18] sm:$0xff]
          %v244 = vmul.f32 %v240, %v240
          %v245 = vmul.f32 %v241, %v241
          %v246 = vmul.f32 %v242, %v242
          %v247 = vmul.f32 %v243, %v243
          %v248 = vadd.f32 %v244, %v245
          %v249 = vadd.f32 %v248, %v246
          %v250 = vadd.f32 %v249, %v247
          %v251 = vrot.slane %v250, 4
          %v252 = vadd.f32 %v250, %v251
          %v253 = vrot.slane %v252, 2
          %v254 = vadd.f32 %v252, %v253
          %v255 = vrot.slane %v254, 1
          %v256 = vadd.f32 %v254, %v255
          %v257 = vrsqrt.pop %v256
          %v258 = vmul.f32 %v256, %v257
          %vm259 = vcmp.eq.f32.partialorder %v256, inf
          %v260 = vsel %vm259, %v256, %v258
          %vm261 = vcmp.eq.f32.partialorder %v256, 0.0
          %v262 = vand.u32 %v256, 2147483648
          %v263 = vsel %vm261, %v262, %v260
          %v264 = vrcp.pop %v263
          %v265 = vmul.f32 1.0, %v264
          %266 = vst [vmem:[#allocation2] sm:$0x1] %v265
        $region40: #{tpu_custom_call.1} parent=31 // pred_fallthru
          _
        %v267 = vld [vmem:[%s235] sm:$0xff]
        %v268 = vld [vmem:[%s197] sm:$0xff]
        %v269 = vld [vmem:[%s197 + $0x8] sm:$0xff]
        %v270 = vld [vmem:[%s197 + $0x10] sm:$0xff]
        %v271 = vld [vmem:[%s197 + $0x18] sm:$0xff]
        %vm272 = vcmask 261120
        %v274 = vsel %vm272, %v267, 0
        %276 = vmatprep.subr.mxu0 0.0
        %277 = vmatpush1.msra.mxu0 %v268
        %278 = vmatprep.subr.mxu0 0.0
        %279 = vmatpush1.msra.mxu0 %v269
        %280 = vmatprep.subr.mxu0 0.0
        %281 = vmatpush1.msra.mxu0 %v270
        %282 = vmatprep.subr.mxu0 0.0
        %283 = vmatpush1.msra.mxu0 %v271
        %284 = vmatprep.subr.mxu0 0.0
        %285 = vmatpush1.msra.mxu0 0.0
        %286 = vmatprep.subr.mxu0 0.0
        %287 = vmatpush1.msra.mxu0 0.0
        %288 = vmatprep.subr.mxu0 0.0
        %289 = vmatpush1.msra.mxu0 0.0
        %290 = vmatprep.subr.mxu0 0.0
        %291 = vmatpush1.msra.mxu0 0.0
        %292 = vmatprep.subr.mxu0 0.0
        %293 = vmatpush1.msra.mxu0 0.0
        %294 = vmatprep.subr.mxu0 0.0
        %295 = vmatpush1.msra.mxu0 0.0
        %296 = vmatprep.subr.mxu0 0.0
        %297 = vmatpush1.msra.mxu0 0.0
        %298 = vmatprep.subr.mxu0 0.0
        %299 = vmatpush1.msra.mxu0 0.0
        %300 = vmatprep.subr.mxu0 0.0
        %301 = vmatpush1.msra.mxu0 0.0
        %302 = vmatprep.subr.mxu0 0.0
        %303 = vmatpush1.msra.mxu0 0.0
        %304 = vmatprep.subr.mxu0 0.0
        %305 = vmatpush1.msra.mxu0 0.0
        %306 = vmatprep.subr.mxu0 0.0
        %307 = vmatpush1.msra.mxu0 0.0
        %308 = vmatprep.subr.mxu0 0.0
        %309 = vmatpush1.msra.mxu0 0.0
        %310 = vmatprep.subr.mxu0 0.0
        %311 = vmatpush1.msra.mxu0 0.0
        %312 = vmatprep.subr.mxu0 0.0
        %313 = vmatpush1.msra.mxu0 0.0
        %314 = vmatprep.subr.mxu0 0.0
        %315 = vmatpush1.msra.mxu0 0.0
        %316 = vmatprep.subr.mxu0 0.0
        %317 = vmatpush1.msra.mxu0 0.0
        %318 = vmatprep.subr.mxu0 0.0
        %319 = vmatpush1.msra.mxu0 0.0
        %320 = vmatprep.subr.mxu0 0.0
        %321 = vmatpush1.msra.mxu0 0.0
        %322 = vmatprep.subr.mxu0 0.0
        %323 = vmatpush1.msra.mxu0 0.0
        %324 = vmatprep.subr.mxu0 0.0
        %325 = vmatpush1.msra.mxu0 0.0
        %326 = vmatprep.subr.mxu0 0.0
        %327 = vmatpush1.msra.mxu0 0.0
        %328 = vmatprep.subr.mxu0 0.0
        %329 = vmatpush1.msra.mxu0 0.0
        %330 = vmatprep.subr.mxu0 0.0
        %331 = vmatpush1.msra.mxu0 0.0
        %332 = vmatprep.subr.mxu0 0.0
        %333 = vmatpush1.msra.mxu0 0.0
        %334 = vmatprep.subr.mxu0 0.0
        %335 = vmatpush1.msra.mxu0 0.0
        %336 = vmatprep.subr.mxu0 0.0
        %337 = vmatpush1.msra.mxu0 0.0
        %338 = vmatprep.subr.mxu0 0.0
        %339 = vmatpush1.msra.mxu0 0.0
        %340 = vmatprep.mubr.f32.mxu0 0.0
        %341 = vmatmul.mubr.f32.gmra.mrb[0].mxu0 %v274
        %v342 = vpop.f32.mrb[0].mxu0
        %v343 = vadd.f32 0.0, %v342
        %v344 = vpop.f32.mrb[0].mxu0
        %345 = vdwg.mxu0
        %v346 = vld [vmem:[#allocation2] sm:$0x1]
        %v348 = vlaneseq
        %v349 = vshrl.u32 %v348, 7
        %v350 = vsub.s32 0, %v349
        %v351 = vrot.slane %v346, %v350
        %v353 = vmul.f32 %v343, %v351
        %v354 = vmax.f32 %v353, -1.0
        %v355 = vmin.f32 %v354, 1.0
        %v356 = vld [vmem:[%s231] sm:$0xff]
        %s357 = smul.u32 %s24, 128
        %v358 = vlaneseq
        %v359 = vand.u32 %v358, 127
        %v360 = vstv %s357
        %v361 = vadd.s32 %v360, %v359
        %362 = vset.pattern.permute.xlu0 0
        %363 = vperm.xlu0 %362, %v356
        %v364 = vpop.permute.xlu0 %363
        %vm365 = vcmp.eq.s32.totalorder %v361, %v364
        %v366 = vmul.f32 %v355, %v355
        %v367 = vsub.f32 1.0, %v366
        %v368 = vmax.f32 %v367, 0.0
        %v369 = vrsqrt.pop %v368
        %v370 = vmul.f32 %v368, %v369
        %vm371 = vcmp.eq.f32.partialorder %v368, inf
        %v372 = vsel %vm371, %v368, %v370
        %vm373 = vcmp.eq.f32.partialorder %v368, 0.0
        %v374 = vand.u32 %v368, 2147483648
        %v375 = vsel %vm373, %v374, %v372
        %v376 = vmul.f32 %v355, 0.87758255
        %v377 = vmul.f32 %v375, 0.47942555
        %v378 = vsub.f32 %v376, %v377
        %v379 = vsel %vm365, %v378, %v355
        %v380 = vmul.f32 %v379, 64.0
        %381 = vst [vmem:[%s227] sm:$0xff] %v380
        %s382 = sand.u32 %s120, 1
        %s383 = scalar_lea.sflag [#allocation5], %s382
        %s384 = sand.u32 %s120, 1
        %s385 = smul.addr %s384, 8
        %s386 = scalar_lea.vmem [#allocation6], %s385
        // Predicated region
        $region41: #{tpu_custom_call.1} parent=31 // pred_check
          %p387 = pneg %p130
        $region42: #{tpu_custom_call.1} parent=31 // pred_check_branch
          %389 = sbr.rel (%p387) target = $region44
        $region43: #{tpu_custom_call.1} parent=31 // pred_region
          %s391 = ssub.s32 128, 128
          %392 = vsyncadd %s383, %s391
          %s393 = smul.addr %s25, 4
          %s394 = sadd.s32 %s24, %s393
          %s395 = smul.addr %s394, 128
          %s396 = scalar_lea.hbm %s3, %s395
          %s398 = sshll.u32 %s386, 4
          %s399 = int_to_ptr.vmem [resolvable:$true] %s398
          %401 = dma.vmem_to_hbm [thread:$0]  %s399, 128, %s396, %s383
        $region44: #{tpu_custom_call.1} parent=31 // pred_fallthru
          _
      $region32: #{tpu_custom_call.1} parent=5 // pred_fallthru
        _
      %p402 = scmp.le.s32.totalorder 2, %s15
      // Predicated region
      $region45: #{tpu_custom_call.1} parent=5 // pred_check
        %p403 = pneg %p402
      $region46: #{tpu_custom_call.1} parent=5 // pred_check_branch
        %405 = sbr.rel (%p403) target = $region48
      $region47: #{tpu_custom_call.1} parent=5 // pred_region
        %s406 = ssub.s32 %s15, 2
        // Predicated region
        $region49: #{tpu_custom_call.1} parent=47 // pred_check
          %p407 = pneg %p136
        $region50: #{tpu_custom_call.1} parent=47 // pred_check_branch
          %409 = sbr.rel (%p407) target = $region52
        $region51: #{tpu_custom_call.1} parent=47 // pred_region
          %s410 = sand.u32 %s121, 1
          %s411 = scalar_lea.sflag [#allocation5], %s410
          %s412 = sand.u32 %s121, 1
          %s413 = smul.addr %s412, 8
          %s414 = scalar_lea.vmem [#allocation6], %s413
          %415 = dma.done %s411, 128
        $region52: #{tpu_custom_call.1} parent=47 // pred_fallthru
          _
      $region48: #{tpu_custom_call.1} parent=5 // pred_fallthru
        _
    $region6: #{tpu_custom_call.1} parent=1 // loop_footer
      %s19 = sadd.s32 1, %s15
    $region7: #{tpu_custom_call.1} parent=1 // loop_footer_branch
      %14 = sbr.rel target = $region3
    $region8: #{tpu_custom_call.1} parent=1 // loop_exit
      _
    %416 = vsyncpa [#allocation4], 1
    %s417 = scalar_lea.sflag [#allocation4], 1
    %418 = vsyncpa %s417, 1
    %419 = vsyncpa [#allocation5], 1
    %s420 = scalar_lea.sflag [#allocation5], 1
    %421 = vsyncpa %s420, 1

</llo_original>
